<compile_context>
chip_gen: v5e
topology: v5e:2x2
jax: 0.10.0
libtpu: 0.0.40
codegen_flags: <defaults>
</compile_context>

<pallas_src>
import functools
import math

import jax
import jax.numpy as jnp
from jax import lax
from jax.experimental import pallas as pl
from jax.experimental.pallas import tpu as pltpu


def concat_conv2d_kernel(x_ref, w_ref, b_ref, o_ref, *, K, W, S, Cin, Nb,
                         precision):
    """y[b] = W_mat @ im2col(x[b]) + bias_eff, for Nb batch elements at once.

    x_ref : (Nb, Cin, S)     flattened spatial planes (S = H*W on lanes)
    w_ref : (Cout, K*K*Cin)  weights, contraction row order (kh, kw, c)
    b_ref : (Cout, 1)        effective bias (time channel folded in), float32
    o_ref : (Nb, Cout, S)    flattened full-domain output (lane-dense)
    """
    dt = x_ref.dtype
    pad = (K - 1) * W + (K - 1)                 # largest im2col shift
    zeros_tail = jnp.zeros((Cin, pad), dt)      # hoisted once; sliced per tap

    xs = [x_ref[b] for b in range(Nb)]          # Nb x (Cin, S)

    # im2col as a register value (no VMEM scratch): row (kh*K + kw)*Cin + c,
    # column b*S + p holds x[b, c, p + kh*W + kw]; positions running past the
    # plane are zero-filled and the corresponding output columns are discarded
    # by the wrapper's (Ho, Wo) slice.
    rows = []
    for kh in range(K):
        for kw in range(K):
            off = kh * W + kw
            if off == 0:
                shifted = xs
            else:
                shifted = [
                    jnp.concatenate([xb[:, off:], zeros_tail[:, :off]], axis=1)
                    for xb in xs
                ]
            rows.append(shifted[0] if Nb == 1
                        else jnp.concatenate(shifted, axis=1))
    bmat = jnp.concatenate(rows, axis=0)        # (K*K*Cin, Nb*S)

    # Single MXU matmul: spatial (and batch) on lanes, f32 accumulation.
    acc = jnp.dot(w_ref[...], bmat, preferred_element_type=jnp.float32,
                  precision=precision)          # (Cout, Nb*S)
    acc = acc + b_ref[...]                      # bias broadcast over lanes

    for b in range(Nb):                         # unmasked 256-lane stores
        o_ref[b] = acc[:, b * S:(b + 1) * S].astype(o_ref.dtype)


def init_concat_conv2d_params(weight_oihw, bias, *, compute_dtype=jnp.bfloat16):
    """Hoisted (per-network, not per-solver-step) weight preprocessing.

    weight_oihw: (Cout, Cin+1, K, K) PyTorch layout (channel 0 = time channel).
    Returns (w_mat, time_w_sum, bias_f32).
    """
    Cout, Cin_p1, K, K2 = weight_oihw.shape
    assert K == K2
    # Per-output-channel sum of the time-channel taps: bias_eff = bias + t*sum.
    time_w_sum = jnp.sum(weight_oihw[:, 0, :, :], axis=(-1, -2))        # (Cout,)
    w_x = weight_oihw[:, 1:, :, :]                                      # (Cout, Cin, K, K)
    # Contraction row order (kh, kw, c), matching the kernel's im2col build.
    w_mat = jnp.transpose(w_x, (0, 2, 3, 1)).reshape(Cout, K * K * (Cin_p1 - 1))
    return (w_mat.astype(compute_dtype),
            time_w_sum.astype(jnp.float32),
            bias.astype(jnp.float32))


@functools.partial(jax.jit, static_argnames=("nb", "slice_output", "precision"))
def concat_conv2d(t, x_nchw, w_mat, time_w_sum, bias, *, nb=None,
                  slice_output=True, precision=None):
    """ConcatConv2d forward. x_nchw: (N, Cin, H, W); w_mat from init_...params."""
    # TODO(synk): only the default path (Conv2d, ksize=3, stride=1, padding=0,
    # dilation=1, groups=1, bias=True, transpose=False) is implemented; the
    # time-channel bias folding is NOT valid for padding>0 or ConvTranspose2d.
    N, Cin, H, W = x_nchw.shape
    Cout, KKC = w_mat.shape
    K = int(round(math.sqrt(KKC // Cin)))
    assert K * K * Cin == KKC
    Ho, Wo = H - K + 1, W - K + 1               # padding=0, stride=1, dilation=1
    S = H * W                                   # flattened full spatial domain

    if nb is None:
        # Default: keep (up to) two grid steps so both v7x TensorCores get
        # work; all remaining batch is folded into the MXU lane axis.  On
        # v5e/v6e (single TC) pass nb=N to collapse to a single grid step.
        target = max(1, pl.cdiv(N, 2))
        nb = max(d for d in range(1, target + 1) if N % d == 0)
    assert N % nb == 0

    # Tiny per-call scalar work: fold the constant time channel into the bias.
    bias_eff = (bias + t * time_w_sum).reshape(Cout, 1)                  # f32

    # Free metadata reshape; cast to the MXU operand dtype (halves input DMA
    # for bf16 — in a real network the producer would emit this dtype directly).
    x_flat = x_nchw.reshape(N, Cin, S).astype(w_mat.dtype)

    kernel = functools.partial(concat_conv2d_kernel, K=K, W=W, S=S, Cin=Cin,
                               Nb=nb, precision=precision)

    flops = 2 * N * Cout * KKC * S
    bytes_accessed = (x_flat.size * x_flat.dtype.itemsize
                      + w_mat.size * w_mat.dtype.itemsize
                      + bias_eff.size * 4
                      + N * Cout * S * x_nchw.dtype.itemsize)

    out_flat = pl.pallas_call(
        kernel,
        out_shape=jax.ShapeDtypeStruct((N, Cout, S), x_nchw.dtype),
        grid_spec=pltpu.PrefetchScalarGridSpec(
            num_scalar_prefetch=0,
            grid=(N // nb,),                    # nb batch elements per step
            in_specs=[
                pl.BlockSpec((nb, Cin, S), lambda n: (n, 0, 0)),
                pl.BlockSpec((Cout, KKC), lambda n: (0, 0)),
                pl.BlockSpec((Cout, 1), lambda n: (0, 0)),
            ],
            out_specs=pl.BlockSpec((nb, Cout, S), lambda n: (n, 0, 0)),
        ),
        compiler_params=pltpu.CompilerParams(dimension_semantics=("parallel",)),
        cost_estimate=pl.CostEstimate(flops=flops, transcendentals=0,
                                      bytes_accessed=bytes_accessed),
    )(x_flat, w_mat, bias_eff)

    out = out_flat.reshape(N, Cout, H, W)       # free metadata reshape
    if slice_output:
        # Valid (padding=0) outputs are the top-left (Ho, Wo) corner.  This is
        # one small extra HBM pass; pass slice_output=False and slice/fuse in
        # the consumer to avoid it (border columns then hold garbage, not NaN).
        out = out[:, :, :Ho, :Wo]
    return out


if __name__ == "__main__":
    # Module config (matches ConcatConv2d(dim_in=4, dim_out=8) defaults).
    dim_in, dim_out, K = 4, 8, 3
    N, H, W = 4, 16, 16        # N=4 -> nb=2: two grid steps of 512 output lanes

    key = jax.random.PRNGKey(0)
    k_w, k_b, k_x = jax.random.split(key, 3)

    # Deterministic parameter init mimicking PyTorch Conv2d default (uniform in
    # +/- 1/sqrt(fan_in)). Weight layout is PyTorch's (Cout, Cin+1, K, K).
    fan_in = (dim_in + 1) * K * K
    bound = 1.0 / math.sqrt(fan_in)
    weight = jax.random.uniform(k_w, (dim_out, dim_in + 1, K, K),
                                jnp.float32, -bound, bound)
    bias = jax.random.uniform(k_b, (dim_out,), jnp.float32, -bound, bound)

    x = jax.random.normal(k_x, (N, dim_in, H, W), jnp.float32)
    t = jnp.float32(0.5)

    # Pure-JAX reference (original ConcatConv2d semantics), exact f32.
    tt = jnp.full((N, 1, H, W), t, dtype=x.dtype)
    ttx = jnp.concatenate([tt, x], axis=1)
    ref = lax.conv_general_dilated(
        ttx, weight, window_strides=(1, 1), padding="VALID",
        dimension_numbers=("NCHW", "OIHW", "NCHW"),
        precision=lax.Precision.HIGHEST,
    ) + bias.reshape(1, dim_out, 1, 1)

    # Fast path: bf16 MXU operands, f32 accumulation (recommended on v6e/v7x).
    w_mat, t_w_sum, bias_f32 = init_concat_conv2d_params(
        weight, bias, compute_dtype=jnp.bfloat16)
    out = concat_conv2d(t, x, w_mat, t_w_sum, bias_f32)
    out = jax.block_until_ready(out)
    assert out.shape == (N, dim_out, H - K + 1, W - K + 1), out.shape
    err_bf16 = float(jnp.max(jnp.abs(out - ref)))
    # Tolerance accounts for bf16 operand rounding (accumulation is f32).
    assert jnp.allclose(out, ref, atol=2e-2, rtol=2e-2), err_bf16

    # Exact path: f32 operands, HIGHEST matmul precision, tight tolerance.
    w_mat32, t_w_sum32, bias32 = init_concat_conv2d_params(
        weight, bias, compute_dtype=jnp.float32)
    out32 = concat_conv2d(t, x, w_mat32, t_w_sum32, bias32,
                          precision=lax.Precision.HIGHEST)
    out32 = jax.block_until_ready(out32)
    err_f32 = float(jnp.max(jnp.abs(out32 - ref)))
    assert jnp.allclose(out32, ref, atol=1e-4, rtol=1e-4), err_f32

    print("KERNEL_OK")
</pallas_src>

<mosaic_0001>
module attributes {stable_mosaic.version = 11 : i64} {
  func.func @concat_conv2d_kernel(%arg0: i32, %arg1: memref<2x4x256xbf16, #tpu.memory_space<vmem>>, %arg2: memref<8x36xbf16, #tpu.memory_space<vmem>>, %arg3: memref<8x1xf32, #tpu.memory_space<vmem>>, %arg4: memref<2x8x256xf32, #tpu.memory_space<vmem>>) attributes {dimension_semantics = [#tpu.dimension_semantics<parallel>], iteration_bounds = array<i64: 2>, scalar_prefetch = 0 : i64, scratch_operands = 0 : i64, tpu.core_type = #tpu.core_type<tc>, window_params = [{transform_indices = @transform_0, window_bounds = array<i64: 2, 4, 256>}, {pipeline_mode = #tpu.pipeline_mode<synchronous>, transform_indices = @transform_1, window_bounds = array<i64: 8, 36>}, {pipeline_mode = #tpu.pipeline_mode<synchronous>, transform_indices = @transform_2, window_bounds = array<i64: 8, 1>}, {transform_indices = @transform_3, window_bounds = array<i64: 2, 8, 256>}]} {
    %cst = arith.constant 0.000000e+00 : bf16
    %0 = vector.broadcast %cst : bf16 to vector<4x34xbf16>
    %c0 = arith.constant 0 : index
    %c0_0 = arith.constant 0 : index
    %c0_1 = arith.constant 0 : index
    %1 = vector.load %arg1[%c0, %c0_0, %c0_1] : memref<2x4x256xbf16, #tpu.memory_space<vmem>>, vector<1x4x256xbf16>
    %2 = vector.shape_cast %1 : vector<1x4x256xbf16> to vector<4x256xbf16>
    %c1 = arith.constant 1 : index
    %c0_2 = arith.constant 0 : index
    %c0_3 = arith.constant 0 : index
    %3 = vector.load %arg1[%c1, %c0_2, %c0_3] : memref<2x4x256xbf16, #tpu.memory_space<vmem>>, vector<1x4x256xbf16>
    %4 = vector.shape_cast %3 : vector<1x4x256xbf16> to vector<4x256xbf16>
    %5 = tpu.concatenate %2, %4 in 1 : vector<4x256xbf16>, vector<4x256xbf16> -> vector<4x512xbf16>
    %6 = vector.extract_strided_slice %2 {offsets = [0, 1], sizes = [4, 255], strides = [1, 1]} : vector<4x256xbf16> to vector<4x255xbf16>
    %7 = vector.extract_strided_slice %0 {offsets = [0, 0], sizes = [4, 1], strides = [1, 1]} : vector<4x34xbf16> to vector<4x1xbf16>
    %8 = tpu.concatenate %6, %7 in 1 : vector<4x255xbf16>, vector<4x1xbf16> -> vector<4x256xbf16>
    %9 = vector.extract_strided_slice %4 {offsets = [0, 1], sizes = [4, 255], strides = [1, 1]} : vector<4x256xbf16> to vector<4x255xbf16>
    %10 = vector.extract_strided_slice %0 {offsets = [0, 0], sizes = [4, 1], strides = [1, 1]} : vector<4x34xbf16> to vector<4x1xbf16>
    %11 = tpu.concatenate %9, %10 in 1 : vector<4x255xbf16>, vector<4x1xbf16> -> vector<4x256xbf16>
    %12 = tpu.concatenate %8, %11 in 1 : vector<4x256xbf16>, vector<4x256xbf16> -> vector<4x512xbf16>
    %13 = vector.extract_strided_slice %2 {offsets = [0, 2], sizes = [4, 254], strides = [1, 1]} : vector<4x256xbf16> to vector<4x254xbf16>
    %14 = vector.extract_strided_slice %0 {offsets = [0, 0], sizes = [4, 2], strides = [1, 1]} : vector<4x34xbf16> to vector<4x2xbf16>
    %15 = tpu.concatenate %13, %14 in 1 : vector<4x254xbf16>, vector<4x2xbf16> -> vector<4x256xbf16>
    %16 = vector.extract_strided_slice %4 {offsets = [0, 2], sizes = [4, 254], strides = [1, 1]} : vector<4x256xbf16> to vector<4x254xbf16>
    %17 = vector.extract_strided_slice %0 {offsets = [0, 0], sizes = [4, 2], strides = [1, 1]} : vector<4x34xbf16> to vector<4x2xbf16>
    %18 = tpu.concatenate %16, %17 in 1 : vector<4x254xbf16>, vector<4x2xbf16> -> vector<4x256xbf16>
    %19 = tpu.concatenate %15, %18 in 1 : vector<4x256xbf16>, vector<4x256xbf16> -> vector<4x512xbf16>
    %20 = vector.extract_strided_slice %2 {offsets = [0, 16], sizes = [4, 240], strides = [1, 1]} : vector<4x256xbf16> to vector<4x240xbf16>
    %21 = vector.extract_strided_slice %0 {offsets = [0, 0], sizes = [4, 16], strides = [1, 1]} : vector<4x34xbf16> to vector<4x16xbf16>
    %22 = tpu.concatenate %20, %21 in 1 : vector<4x240xbf16>, vector<4x16xbf16> -> vector<4x256xbf16>
    %23 = vector.extract_strided_slice %4 {offsets = [0, 16], sizes = [4, 240], strides = [1, 1]} : vector<4x256xbf16> to vector<4x240xbf16>
    %24 = vector.extract_strided_slice %0 {offsets = [0, 0], sizes = [4, 16], strides = [1, 1]} : vector<4x34xbf16> to vector<4x16xbf16>
    %25 = tpu.concatenate %23, %24 in 1 : vector<4x240xbf16>, vector<4x16xbf16> -> vector<4x256xbf16>
    %26 = tpu.concatenate %22, %25 in 1 : vector<4x256xbf16>, vector<4x256xbf16> -> vector<4x512xbf16>
    %27 = vector.extract_strided_slice %2 {offsets = [0, 17], sizes = [4, 239], strides = [1, 1]} : vector<4x256xbf16> to vector<4x239xbf16>
    %28 = vector.extract_strided_slice %0 {offsets = [0, 0], sizes = [4, 17], strides = [1, 1]} : vector<4x34xbf16> to vector<4x17xbf16>
    %29 = tpu.concatenate %27, %28 in 1 : vector<4x239xbf16>, vector<4x17xbf16> -> vector<4x256xbf16>
    %30 = vector.extract_strided_slice %4 {offsets = [0, 17], sizes = [4, 239], strides = [1, 1]} : vector<4x256xbf16> to vector<4x239xbf16>
    %31 = vector.extract_strided_slice %0 {offsets = [0, 0], sizes = [4, 17], strides = [1, 1]} : vector<4x34xbf16> to vector<4x17xbf16>
    %32 = tpu.concatenate %30, %31 in 1 : vector<4x239xbf16>, vector<4x17xbf16> -> vector<4x256xbf16>
    %33 = tpu.concatenate %29, %32 in 1 : vector<4x256xbf16>, vector<4x256xbf16> -> vector<4x512xbf16>
    %34 = vector.extract_strided_slice %2 {offsets = [0, 18], sizes = [4, 238], strides = [1, 1]} : vector<4x256xbf16> to vector<4x238xbf16>
    %35 = vector.extract_strided_slice %0 {offsets = [0, 0], sizes = [4, 18], strides = [1, 1]} : vector<4x34xbf16> to vector<4x18xbf16>
    %36 = tpu.concatenate %34, %35 in 1 : vector<4x238xbf16>, vector<4x18xbf16> -> vector<4x256xbf16>
    %37 = vector.extract_strided_slice %4 {offsets = [0, 18], sizes = [4, 238], strides = [1, 1]} : vector<4x256xbf16> to vector<4x238xbf16>
    %38 = vector.extract_strided_slice %0 {offsets = [0, 0], sizes = [4, 18], strides = [1, 1]} : vector<4x34xbf16> to vector<4x18xbf16>
    %39 = tpu.concatenate %37, %38 in 1 : vector<4x238xbf16>, vector<4x18xbf16> -> vector<4x256xbf16>
    %40 = tpu.concatenate %36, %39 in 1 : vector<4x256xbf16>, vector<4x256xbf16> -> vector<4x512xbf16>
    %41 = vector.extract_strided_slice %2 {offsets = [0, 32], sizes = [4, 224], strides = [1, 1]} : vector<4x256xbf16> to vector<4x224xbf16>
    %42 = vector.extract_strided_slice %0 {offsets = [0, 0], sizes = [4, 32], strides = [1, 1]} : vector<4x34xbf16> to vector<4x32xbf16>
    %43 = tpu.concatenate %41, %42 in 1 : vector<4x224xbf16>, vector<4x32xbf16> -> vector<4x256xbf16>
    %44 = vector.extract_strided_slice %4 {offsets = [0, 32], sizes = [4, 224], strides = [1, 1]} : vector<4x256xbf16> to vector<4x224xbf16>
    %45 = vector.extract_strided_slice %0 {offsets = [0, 0], sizes = [4, 32], strides = [1, 1]} : vector<4x34xbf16> to vector<4x32xbf16>
    %46 = tpu.concatenate %44, %45 in 1 : vector<4x224xbf16>, vector<4x32xbf16> -> vector<4x256xbf16>
    %47 = tpu.concatenate %43, %46 in 1 : vector<4x256xbf16>, vector<4x256xbf16> -> vector<4x512xbf16>
    %48 = vector.extract_strided_slice %2 {offsets = [0, 33], sizes = [4, 223], strides = [1, 1]} : vector<4x256xbf16> to vector<4x223xbf16>
    %49 = vector.extract_strided_slice %0 {offsets = [0, 0], sizes = [4, 33], strides = [1, 1]} : vector<4x34xbf16> to vector<4x33xbf16>
    %50 = tpu.concatenate %48, %49 in 1 : vector<4x223xbf16>, vector<4x33xbf16> -> vector<4x256xbf16>
    %51 = vector.extract_strided_slice %4 {offsets = [0, 33], sizes = [4, 223], strides = [1, 1]} : vector<4x256xbf16> to vector<4x223xbf16>
    %52 = vector.extract_strided_slice %0 {offsets = [0, 0], sizes = [4, 33], strides = [1, 1]} : vector<4x34xbf16> to vector<4x33xbf16>
    %53 = tpu.concatenate %51, %52 in 1 : vector<4x223xbf16>, vector<4x33xbf16> -> vector<4x256xbf16>
    %54 = tpu.concatenate %50, %53 in 1 : vector<4x256xbf16>, vector<4x256xbf16> -> vector<4x512xbf16>
    %55 = vector.extract_strided_slice %2 {offsets = [0, 34], sizes = [4, 222], strides = [1, 1]} : vector<4x256xbf16> to vector<4x222xbf16>
    %56 = tpu.concatenate %55, %0 in 1 : vector<4x222xbf16>, vector<4x34xbf16> -> vector<4x256xbf16>
    %57 = vector.extract_strided_slice %4 {offsets = [0, 34], sizes = [4, 222], strides = [1, 1]} : vector<4x256xbf16> to vector<4x222xbf16>
    %58 = tpu.concatenate %57, %0 in 1 : vector<4x222xbf16>, vector<4x34xbf16> -> vector<4x256xbf16>
    %59 = tpu.concatenate %56, %58 in 1 : vector<4x256xbf16>, vector<4x256xbf16> -> vector<4x512xbf16>
    %60 = tpu.concatenate %5, %12, %19, %26, %33, %40, %47, %54, %59 in 0 : vector<4x512xbf16>, vector<4x512xbf16>, vector<4x512xbf16>, vector<4x512xbf16>, vector<4x512xbf16>, vector<4x512xbf16>, vector<4x512xbf16>, vector<4x512xbf16>, vector<4x512xbf16> -> vector<36x512xbf16>
    %c0_4 = arith.constant 0 : index
    %c0_5 = arith.constant 0 : index
    %61 = vector.load %arg2[%c0_4, %c0_5] : memref<8x36xbf16, #tpu.memory_space<vmem>>, vector<8x36xbf16>
    %cst_6 = arith.constant dense<0.000000e+00> : vector<8x512xf32>
    %62 = tpu.matmul %61, %60, %cst_6 {dimension_numbers = #tpu.dot_dimension_numbers<[1], [0], [0], [1], [0, 0, 1, 1], [], []>} : vector<8x36xbf16>, vector<36x512xbf16>, vector<8x512xf32> -> vector<8x512xf32>
    %c0_7 = arith.constant 0 : index
    %c0_8 = arith.constant 0 : index
    %63 = vector.load %arg3[%c0_7, %c0_8] : memref<8x1xf32, #tpu.memory_space<vmem>>, vector<8x1xf32>
    %64 = vector.broadcast %63 : vector<8x1xf32> to vector<8x512xf32>
    %65 = arith.addf %62, %64 : vector<8x512xf32>
    %66 = vector.extract_strided_slice %65 {offsets = [0, 0], sizes = [8, 256], strides = [1, 1]} : vector<8x512xf32> to vector<8x256xf32>
    %c0_9 = arith.constant 0 : index
    %c0_10 = arith.constant 0 : index
    %c0_11 = arith.constant 0 : index
    %67 = vector.load %arg4[%c0_9, %c0_10, %c0_11] : memref<2x8x256xf32, #tpu.memory_space<vmem>>, vector<1x8x256xf32>
    %68 = vector.shape_cast %67 : vector<1x8x256xf32> to vector<8x256xf32>
    %69 = vector.shape_cast %66 : vector<8x256xf32> to vector<1x8x256xf32>
    tpu.vector_store %arg4[%c0_9, %c0_10, %c0_11], %69 {strides = array<i32>} : memref<2x8x256xf32, #tpu.memory_space<vmem>>, vector<1x8x256xf32>,
    %70 = vector.extract_strided_slice %65 {offsets = [0, 256], sizes = [8, 256], strides = [1, 1]} : vector<8x512xf32> to vector<8x256xf32>
    %c1_12 = arith.constant 1 : index
    %c0_13 = arith.constant 0 : index
    %c0_14 = arith.constant 0 : index
    %71 = vector.load %arg4[%c1_12, %c0_13, %c0_14] : memref<2x8x256xf32, #tpu.memory_space<vmem>>, vector<1x8x256xf32>
    %72 = vector.shape_cast %71 : vector<1x8x256xf32> to vector<8x256xf32>
    %73 = vector.shape_cast %70 : vector<8x256xf32> to vector<1x8x256xf32>
    tpu.vector_store %arg4[%c1_12, %c0_13, %c0_14], %73 {strides = array<i32>} : memref<2x8x256xf32, #tpu.memory_space<vmem>>, vector<1x8x256xf32>,
    return
  }
  func.func @transform_0(%arg0: i32) -> (i32, i32, i32) {
    %c0_i32 = arith.constant 0 : i32
    %c0_i32_0 = arith.constant 0 : i32
    %c0_i32_1 = arith.constant 0 : i32
    return %arg0, %c0_i32, %c0_i32_0 : i32, i32, i32
  }
  func.func @transform_1(%arg0: i32) -> (i32, i32) {
    %c0_i32 = arith.constant 0 : i32
    %c0_i32_0 = arith.constant 0 : i32
    %c0_i32_1 = arith.constant 0 : i32
    return %c0_i32, %c0_i32_0 : i32, i32
  }
  func.func @transform_2(%arg0: i32) -> (i32, i32) {
    %c0_i32 = arith.constant 0 : i32
    %c0_i32_0 = arith.constant 0 : i32
    %c0_i32_1 = arith.constant 0 : i32
    return %c0_i32, %c0_i32_0 : i32, i32
  }
  func.func @transform_3(%arg0: i32) -> (i32, i32, i32) {
    %c0_i32 = arith.constant 0 : i32
    %c0_i32_0 = arith.constant 0 : i32
    %c0_i32_1 = arith.constant 0 : i32
    return %arg0, %c0_i32, %c0_i32_0 : i32, i32, i32
  }
}

</mosaic_0001>

<llo_original>
// kernel: concat_conv2d.1
$region0: #{concat_conv2d.1}
  #allocation0 [shape = 'u32[]', space=smem, size = 0x4, offset = 0x4, fixed_abs, tag = 'smem constant byte address 0x4 - core index']
  #allocation1 [shape = 'u32[72,128]{1,0:T(1,128)}', space=vmem, size = 0x9000, scoped, tag = 'internal scratch']
  %s0 = inlined_call_operand.vmem [shape: bf16[4,4,256], index: 0, kind: input, shape index: {}]
  %s1 = inlined_call_operand.vmem [shape: bf16[8,36], index: 1, kind: input, shape index: {}]
  %s2 = inlined_call_operand.vmem [shape: f32[8,1], index: 2, kind: input, shape index: {}]
  %s3 = inlined_call_operand.vmem [shape: f32[4,8,256], index: 3, kind: output, shape index: {}]
  %s4 = sld [smem:[#allocation0]]
  $region45: #{concat_conv2d.1} parent=0
    _
  %s6 = ssub.s32 1, %s4
  %s7 = scalar_select 0, %s6, %s4
  loop: start=0, step=1, limit=4
  $region2: #{concat_conv2d.1} parent=0 // loop_pre_header
    _
  $region3: #{concat_conv2d.1} parent=0 // loop_header
    %s9 = sphi 0, %s13
    %p10 = scmp.ge.s32.totalorder %s9, 4
    %s19 = sphi 0, %s21
    %s22 = sphi 0, %s19
    %s23 = sphi 0, %s22
    %s39 = sphi 0, %s23
    %s43 = sphi 0, %s43
    %s45 = sphi 0, %s43
    %s46 = sphi 0, %s45
    %s60 = sphi 0, %s46
    %s64 = sphi 0, %s64
    %s66 = sphi 0, %s64
    %s67 = sphi 0, %s66
    %s81 = sphi 0, %s67
    %s87 = sphi 0, %s89
    %s90 = sphi 0, %s87
    %s91 = sphi 0, %s90
    %s107 = sphi 0, %s91
  $region4: #{concat_conv2d.1} parent=0 // loop_header_branch
    %12 = sbr.rel (%p10) target = $region8
  $region5: #{concat_conv2d.1} parent=0 // loop_body
    %s14 = ssub.s32 %s9, 1
    %s15 = ssub.s32 %s9, 2
    %s16 = sadd.s32 %s9, 1
    %s17 = ssub.s32 %s9, %s16
    %p18 = scmp.eq.s32.totalorder %s17, 0
    %s20 = sadd.s32 %s19, 1
    %s21 = scalar_select %p18, %s19, %s20
    %p24 = pneg %p18
    %p25 = scmp.eq.s32.totalorder %s9, 1
    %p26 = por %p24, %p25
    %p27 = scmp.ne.s32.totalorder %s19, %s22
    %p28 = scmp.eq.s32.totalorder %s9, 0
    %p29 = por %p27, %p28
    %p30 = scmp.ne.s32.totalorder %s19, %s22
    %p31 = scmp.eq.s32.totalorder %s14, 1
    %p32 = por %p30, %p31
    %p33 = scmp.ne.s32.totalorder %s22, %s23
    %p34 = scmp.eq.s32.totalorder %s14, 0
    %p35 = por %p33, %p34
    %p36 = scmp.ne.s32.totalorder %s22, %s23
    %p37 = scmp.eq.s32.totalorder %s15, 1
    %p38 = por %p36, %p37
    %p40 = scmp.ne.s32.totalorder %s23, %s39
    %p41 = scmp.eq.s32.totalorder %s15, 0
    %p42 = por %p40, %p41
    %s44 = sadd.s32 %s43, 1
    %p47 = scmp.eq.s32.totalorder %s9, 1
    %p48 = scmp.ne.s32.totalorder %s43, %s45
    %p49 = scmp.eq.s32.totalorder %s9, 0
    %p50 = por %p48, %p49
    %p51 = scmp.ne.s32.totalorder %s43, %s45
    %p52 = scmp.eq.s32.totalorder %s14, 1
    %p53 = por %p51, %p52
    %p54 = scmp.ne.s32.totalorder %s45, %s46
    %p55 = scmp.eq.s32.totalorder %s14, 0
    %p56 = por %p54, %p55
    %p57 = scmp.ne.s32.totalorder %s45, %s46
    %p58 = scmp.eq.s32.totalorder %s15, 1
    %p59 = por %p57, %p58
    %p61 = scmp.ne.s32.totalorder %s46, %s60
    %p62 = scmp.eq.s32.totalorder %s15, 0
    %p63 = por %p61, %p62
    %s65 = sadd.s32 %s64, 1
    %p68 = scmp.eq.s32.totalorder %s9, 1
    %p69 = scmp.ne.s32.totalorder %s64, %s66
    %p70 = scmp.eq.s32.totalorder %s9, 0
    %p71 = por %p69, %p70
    %p72 = scmp.ne.s32.totalorder %s64, %s66
    %p73 = scmp.eq.s32.totalorder %s14, 1
    %p74 = por %p72, %p73
    %p75 = scmp.ne.s32.totalorder %s66, %s67
    %p76 = scmp.eq.s32.totalorder %s14, 0
    %p77 = por %p75, %p76
    %p78 = scmp.ne.s32.totalorder %s66, %s67
    %p79 = scmp.eq.s32.totalorder %s15, 1
    %p80 = por %p78, %p79
    %p82 = scmp.ne.s32.totalorder %s67, %s81
    %p83 = scmp.eq.s32.totalorder %s15, 0
    %p84 = por %p82, %p83
    %s85 = ssub.s32 %s9, %s16
    %p86 = scmp.eq.s32.totalorder %s85, 0
    %s88 = sadd.s32 %s87, 1
    %s89 = scalar_select %p86, %s87, %s88
    %p92 = pneg %p86
    %p93 = scmp.eq.s32.totalorder %s9, 1
    %p94 = por %p92, %p93
    %p95 = scmp.ne.s32.totalorder %s87, %s90
    %p96 = scmp.eq.s32.totalorder %s9, 0
    %p97 = por %p95, %p96
    %p98 = scmp.ne.s32.totalorder %s87, %s90
    %p99 = scmp.eq.s32.totalorder %s14, 1
    %p100 = por %p98, %p99
    %p101 = scmp.ne.s32.totalorder %s90, %s91
    %p102 = scmp.eq.s32.totalorder %s14, 0
    %p103 = por %p101, %p102
    %p104 = scmp.ne.s32.totalorder %s90, %s91
    %p105 = scmp.eq.s32.totalorder %s15, 1
    %p106 = por %p104, %p105
    %p108 = scmp.ne.s32.totalorder %s91, %s107
    %p109 = scmp.eq.s32.totalorder %s15, 0
    %p110 = por %p108, %p109
    %p111 = scmp.le.s32.totalorder 1, %s9
    %p112 = scmp.lt.s32.totalorder %s9, 3
    %p113 = pnand %p111, %p112
    %p114 = pneg %p113
    // Predicated region
    $region9: #{concat_conv2d.1} parent=5 // pred_check
      _
    $region10: #{concat_conv2d.1} parent=5 // pred_check_branch
      %116 = sbr.rel (%p113) target = $region12
    $region11: #{concat_conv2d.1} parent=5 // pred_region
      %s117 = ssub.s32 %s9, 1
      // Predicated region
      $region13: #{concat_conv2d.1} parent=11 // pred_check
        %p118 = pneg %p56
      $region14: #{concat_conv2d.1} parent=11 // pred_check_branch
        %120 = sbr.rel (%p118) target = $region16
      $region15: #{concat_conv2d.1} parent=11 // pred_region
        _
      $region16: #{concat_conv2d.1} parent=11 // pred_fallthru
        _
      // Predicated region
      $region17: #{concat_conv2d.1} parent=11 // pred_check
        %p121 = pneg %p77
      $region18: #{concat_conv2d.1} parent=11 // pred_check_branch
        %123 = sbr.rel (%p121) target = $region20
      $region19: #{concat_conv2d.1} parent=11 // pred_region
        _
      $region20: #{concat_conv2d.1} parent=11 // pred_fallthru
        _
    $region12: #{concat_conv2d.1} parent=5 // pred_fallthru
      _
    %p124 = scmp.lt.s32.totalorder %s9, 2
    // Predicated region
    $region21: #{concat_conv2d.1} parent=5 // pred_check
      %p125 = pneg %p124
    $region22: #{concat_conv2d.1} parent=5 // pred_check_branch
      %127 = sbr.rel (%p125) target = $region24
    $region23: #{concat_conv2d.1} parent=5 // pred_region
      // Predicated region
      $region25: #{concat_conv2d.1} parent=23 // pred_check
        %p128 = pneg %p29
      $region26: #{concat_conv2d.1} parent=23 // pred_check_branch
        %130 = sbr.rel (%p128) target = $region28
      $region27: #{concat_conv2d.1} parent=23 // pred_region
        %s131 = smul.u32 2, %s9
        %p132 = scmp.lt.s32.totalorder %s131, 3
        %s133 = scalar_select %p132, %s131, 3
        %s134 = smul.addr %s133, 2
        %s135 = smul.addr %s134, 2
        %s136 = scalar_lea.vmem %s0, %s135
        %s137 = smul.u32 2, %s9
      $region28: #{concat_conv2d.1} parent=23 // pred_fallthru
        _
    $region24: #{concat_conv2d.1} parent=5 // pred_fallthru
      _
    %p138 = scmp.le.s32.totalorder 1, %s9
    %p139 = scmp.lt.s32.totalorder %s9, 3
    %p140 = pnand %p138, %p139
    %p141 = pneg %p140
    // Predicated region
    $region29: #{concat_conv2d.1} parent=5 // pred_check
      _
    $region30: #{concat_conv2d.1} parent=5 // pred_check_branch
      %143 = sbr.rel (%p140) target = $region32
    $region31: #{concat_conv2d.1} parent=5 // pred_region
      %s144 = ssub.s32 %s9, 1
      %s145 = smul.u32 2, %s14
      %p146 = scmp.lt.s32.totalorder %s145, 3
      %s147 = scalar_select %p146, %s145, 3
      %s148 = smul.addr %s147, 2
      %s149 = smul.addr %s148, 2
      %s150 = scalar_lea.vmem %s0, %s149
      %p151 = pneg %p35
      %p152 = pneg %p32
      %p153 = pneg %p56
      %p154 = pneg %p53
      %p155 = pneg %p77
      %p156 = pneg %p74
      %p157 = pneg %p103
      %p158 = pneg %p100
      %s159 = smul.u32 2, %s14
      %p160 = scmp.lt.s32.totalorder %s159, 3
      %s161 = scalar_select %p160, %s159, 3
      %s162 = smul.addr %s161, 2
      %s163 = smul.addr %s162, 8
      %s164 = scalar_lea.vmem %s3, %s163
      %s165 = smul.u32 2, %s14
      %p166 = scmp.lt.s32.totalorder %s165, 3
      %s167 = scalar_select %p166, %s165, 3
      %s168 = smul.addr %s167, 2
      %s169 = smul.addr %s168, 2
      %s170 = scalar_lea.vmem %s0, %s169
      %s171 = smul.u32 2, %s14
      %s172 = smul.u32 2, %s14
      %p173 = scmp.lt.s32.totalorder %s172, 3
      %s174 = scalar_select %p173, %s172, 3
      %s175 = smul.addr %s174, 2
      %s176 = smul.addr %s175, 8
      %s177 = scalar_lea.vmem %s3, %s176
      %s178 = smul.u32 2, %s14
      %v180 = vld [vmem:[%s170] sm:$0xf]
      %s181 = scalar_lea.vmem %s170, 4
      %v182 = vld [vmem:[%s181] sm:$0xf]
      %184 = vst [vmem:[#allocation1] ss:$4 sm:$0xff] %v180
      %v185 = vld.sshfl [vmem:[#allocation1] sm:$0xff pattern:$0x73625140]
      %v186 = vld.sshfl [vmem:[#allocation1 + $0x8] sm:$0xff pattern:$0x73625140]
      %188 = vst [vmem:[#allocation1] ss:$4 sm:$0xff] %v182
      %v189 = vld.sshfl [vmem:[#allocation1] sm:$0xff pattern:$0x73625140]
      %v190 = vld.sshfl [vmem:[#allocation1 + $0x8] sm:$0xff pattern:$0x73625140]
      %191 = vst [vmem:[#allocation1] ss:$4 sm:$0xff] %v180
      %v192 = vld.sshfl [vmem:[#allocation1] sm:$0xff pattern:$0x73625140]
      %v194 = vld.sshfl [vmem:[#allocation1 + $0x8] sm:$0xff pattern:$0x73625140]
      %196 = vrot.lane.b32.xlu0 %v192, 127
      %v197 = vpop.permute.xlu0 %196
      %198 = vrot.lane.b32.xlu0 %v194, 127
      %v199 = vpop.permute.xlu0 %198
      %vm200 = vcmask 1039360
      %v201 = vsel %vm200, %v197, %v199
      %vm202 = vcmask 1039360
      %v205 = vsel %vm202, %v199, 0
      %206 = vst [vmem:[#allocation1] ss:$4 sm:$0xff] %v182
      %v207 = vld.sshfl [vmem:[#allocation1] sm:$0xff pattern:$0x73625140]
      %v209 = vld.sshfl [vmem:[#allocation1 + $0x8] sm:$0xff pattern:$0x73625140]
      %211 = vrot.lane.b32.xlu0 %v207, 127
      %v212 = vpop.permute.xlu0 %211
      %213 = vrot.lane.b32.xlu0 %v209, 127
      %v214 = vpop.permute.xlu0 %213
      %v215 = vsel %vm200, %v212, %v214
      %v217 = vsel %vm202, %v214, 0
      %218 = vst [vmem:[#allocation1] ss:$4 sm:$0xff] %v180
      %v219 = vld.sshfl [vmem:[#allocation1] sm:$0xff pattern:$0x73625140]
      %v221 = vld.sshfl [vmem:[#allocation1 + $0x8] sm:$0xff pattern:$0x73625140]
      %223 = vrot.lane.b32.xlu0 %v219, 126
      %v224 = vpop.permute.xlu0 %223
      %225 = vrot.lane.b32.xlu0 %v221, 126
      %v226 = vpop.permute.xlu0 %225
      %vm227 = vcmask 1031168
      %v228 = vsel %vm227, %v224, %v226
      %vm229 = vcmask 1031168
      %v231 = vsel %vm229, %v226, 0
      %232 = vst [vmem:[#allocation1] ss:$4 sm:$0xff] %v182
      %v233 = vld.sshfl [vmem:[#allocation1] sm:$0xff pattern:$0x73625140]
      %v235 = vld.sshfl [vmem:[#allocation1 + $0x8] sm:$0xff pattern:$0x73625140]
      %237 = vrot.lane.b32.xlu0 %v233, 126
      %v238 = vpop.permute.xlu0 %237
      %239 = vrot.lane.b32.xlu0 %v235, 126
      %v240 = vpop.permute.xlu0 %239
      %v241 = vsel %vm227, %v238, %v240
      %v243 = vsel %vm229, %v240, 0
      %244 = vst [vmem:[#allocation1] ss:$4 sm:$0xff] %v180
      %v245 = vld.sshfl [vmem:[#allocation1] sm:$0xff pattern:$0x73625140]
      %v247 = vld.sshfl [vmem:[#allocation1 + $0x8] sm:$0xff pattern:$0x73625140]
      %249 = vrot.lane.b32.xlu0 %v245, 112
      %v250 = vpop.permute.xlu0 %249
      %251 = vrot.lane.b32.xlu0 %v247, 112
      %v252 = vpop.permute.xlu0 %251
      %vm253 = vcmask 916480
      %v254 = vsel %vm253, %v250, %v252
      %vm255 = vcmask 916480
      %v257 = vsel %vm255, %v252, 0
      %258 = vst [vmem:[#allocation1] ss:$4 sm:$0xff] %v182
      %v259 = vld.sshfl [vmem:[#allocation1] sm:$0xff pattern:$0x73625140]
      %v261 = vld.sshfl [vmem:[#allocation1 + $0x8] sm:$0xff pattern:$0x73625140]
      %263 = vrot.lane.b32.xlu0 %v259, 112
      %v264 = vpop.permute.xlu0 %263
      %265 = vrot.lane.b32.xlu0 %v261, 112
      %v266 = vpop.permute.xlu0 %265
      %v267 = vsel %vm253, %v264, %v266
      %v269 = vsel %vm255, %v266, 0
      %270 = vst [vmem:[#allocation1] ss:$4 sm:$0xff] %v180
      %v271 = vld.sshfl [vmem:[#allocation1] sm:$0xff pattern:$0x73625140]
      %v273 = vld.sshfl [vmem:[#allocation1 + $0x8] sm:$0xff pattern:$0x73625140]
      %275 = vrot.lane.b32.xlu0 %v271, 111
      %v276 = vpop.permute.xlu0 %275
      %277 = vrot.lane.b32.xlu0 %v273, 111
      %v278 = vpop.permute.xlu0 %277
      %vm279 = vcmask 908288
      %v280 = vsel %vm279, %v276, %v278
      %vm281 = vcmask 908288
      %v283 = vsel %vm281, %v278, 0
      %284 = vst [vmem:[#allocation1] ss:$4 sm:$0xff] %v182
      %v285 = vld.sshfl [vmem:[#allocation1] sm:$0xff pattern:$0x73625140]
      %v287 = vld.sshfl [vmem:[#allocation1 + $0x8] sm:$0xff pattern:$0x73625140]
      %289 = vrot.lane.b32.xlu0 %v285, 111
      %v290 = vpop.permute.xlu0 %289
      %291 = vrot.lane.b32.xlu0 %v287, 111
      %v292 = vpop.permute.xlu0 %291
      %v293 = vsel %vm279, %v290, %v292
      %v295 = vsel %vm281, %v292, 0
      %296 = vst [vmem:[#allocation1] ss:$4 sm:$0xff] %v180
      %v297 = vld.sshfl [vmem:[#allocation1] sm:$0xff pattern:$0x73625140]
      %v299 = vld.sshfl [vmem:[#allocation1 + $0x8] sm:$0xff pattern:$0x73625140]
      %301 = vrot.lane.b32.xlu0 %v297, 110
      %v302 = vpop.permute.xlu0 %301
      %303 = vrot.lane.b32.xlu0 %v299, 110
      %v304 = vpop.permute.xlu0 %303
      %vm305 = vcmask 900096
      %v306 = vsel %vm305, %v302, %v304
      %vm307 = vcmask 900096
      %v309 = vsel %vm307, %v304, 0
      %310 = vst [vmem:[#allocation1] ss:$4 sm:$0xff] %v182
      %v311 = vld.sshfl [vmem:[#allocation1] sm:$0xff pattern:$0x73625140]
      %v313 = vld.sshfl [vmem:[#allocation1 + $0x8] sm:$0xff pattern:$0x73625140]
      %315 = vrot.lane.b32.xlu0 %v311, 110
      %v316 = vpop.permute.xlu0 %315
      %317 = vrot.lane.b32.xlu0 %v313, 110
      %v318 = vpop.permute.xlu0 %317
      %v319 = vsel %vm305, %v316, %v318
      %v321 = vsel %vm307, %v318, 0
      %322 = vst [vmem:[#allocation1] ss:$4 sm:$0xff] %v180
      %v323 = vld.sshfl [vmem:[#allocation1] sm:$0xff pattern:$0x73625140]
      %v325 = vld.sshfl [vmem:[#allocation1 + $0x8] sm:$0xff pattern:$0x73625140]
      %327 = vrot.lane.b32.xlu0 %v323, 96
      %v328 = vpop.permute.xlu0 %327
      %329 = vrot.lane.b32.xlu0 %v325, 96
      %v330 = vpop.permute.xlu0 %329
      %vm331 = vcmask 785408
      %v332 = vsel %vm331, %v328, %v330
      %vm333 = vcmask 785408
      %v335 = vsel %vm333, %v330, 0
      %336 = vst [vmem:[#allocation1] ss:$4 sm:$0xff] %v182
      %v337 = vld.sshfl [vmem:[#allocation1] sm:$0xff pattern:$0x73625140]
      %v339 = vld.sshfl [vmem:[#allocation1 + $0x8] sm:$0xff pattern:$0x73625140]
      %341 = vrot.lane.b32.xlu0 %v337, 96
      %v342 = vpop.permute.xlu0 %341
      %343 = vrot.lane.b32.xlu0 %v339, 96
      %v344 = vpop.permute.xlu0 %343
      %v345 = vsel %vm331, %v342, %v344
      %v347 = vsel %vm333, %v344, 0
      %348 = vst [vmem:[#allocation1] ss:$4 sm:$0xff] %v180
      %v349 = vld.sshfl [vmem:[#allocation1] sm:$0xff pattern:$0x73625140]
      %v351 = vld.sshfl [vmem:[#allocation1 + $0x8] sm:$0xff pattern:$0x73625140]
      %353 = vrot.lane.b32.xlu0 %v349, 95
      %v354 = vpop.permute.xlu0 %353
      %355 = vrot.lane.b32.xlu0 %v351, 95
      %v356 = vpop.permute.xlu0 %355
      %vm357 = vcmask 777216
      %v358 = vsel %vm357, %v354, %v356
      %vm359 = vcmask 777216
      %v361 = vsel %vm359, %v356, 0
      %362 = vst [vmem:[#allocation1] ss:$4 sm:$0xff] %v182
      %v363 = vld.sshfl [vmem:[#allocation1] sm:$0xff pattern:$0x73625140]
      %v365 = vld.sshfl [vmem:[#allocation1 + $0x8] sm:$0xff pattern:$0x73625140]
      %367 = vrot.lane.b32.xlu0 %v363, 95
      %v368 = vpop.permute.xlu0 %367
      %369 = vrot.lane.b32.xlu0 %v365, 95
      %v370 = vpop.permute.xlu0 %369
      %v371 = vsel %vm357, %v368, %v370
      %v373 = vsel %vm359, %v370, 0
      %374 = vst [vmem:[#allocation1] ss:$4 sm:$0xff] %v180
      %v375 = vld.sshfl [vmem:[#allocation1] sm:$0xff pattern:$0x73625140]
      %v377 = vld.sshfl [vmem:[#allocation1 + $0x8] sm:$0xff pattern:$0x73625140]
      %379 = vrot.lane.b32.xlu0 %v375, 94
      %v380 = vpop.permute.xlu0 %379
      %381 = vrot.lane.b32.xlu0 %v377, 94
      %v382 = vpop.permute.xlu0 %381
      %vm383 = vcmask 769024
      %v384 = vsel %vm383, %v380, %v382
      %vm385 = vcmask 769024
      %v387 = vsel %vm385, %v382, 0
      %388 = vst [vmem:[#allocation1] ss:$4 sm:$0xff] %v182
      %v389 = vld.sshfl [vmem:[#allocation1] sm:$0xff pattern:$0x73625140]
      %v391 = vld.sshfl [vmem:[#allocation1 + $0x8] sm:$0xff pattern:$0x73625140]
      %393 = vrot.lane.b32.xlu0 %v389, 94
      %v394 = vpop.permute.xlu0 %393
      %395 = vrot.lane.b32.xlu0 %v391, 94
      %v396 = vpop.permute.xlu0 %395
      %v397 = vsel %vm383, %v394, %v396
      %v399 = vsel %vm385, %v396, 0
      %v402 = vrot.slane %v201, 6
      %v403 = vrot.slane %v205, 6
      %v404 = vrot.slane %v215, 6
      %v405 = vrot.slane %v217, 6
      %v408 = vrot.slane %v228, 4
      %v409 = vrot.slane %v231, 4
      %v410 = vrot.slane %v241, 4
      %v411 = vrot.slane %v243, 4
      %v414 = vrot.slane %v254, 2
      %v415 = vrot.slane %v257, 2
      %v416 = vrot.slane %v267, 2
      %v417 = vrot.slane %v269, 2
      %v420 = vrot.slane %v306, 6
      %v421 = vrot.slane %v309, 6
      %v422 = vrot.slane %v319, 6
      %v423 = vrot.slane %v321, 6
      %v426 = vrot.slane %v332, 4
      %v427 = vrot.slane %v335, 4
      %v428 = vrot.slane %v345, 4
      %v429 = vrot.slane %v347, 4
      %v432 = vrot.slane %v358, 2
      %v433 = vrot.slane %v361, 2
      %v434 = vrot.slane %v371, 2
      %v435 = vrot.slane %v373, 2
      %vm436 = vcmask 1041408
      %v438 = vsel %vm436, %v185, %v402
      %v440 = vsel %vm436, %v186, %v403
      %v442 = vsel %vm436, %v189, %v404
      %v444 = vsel %vm436, %v190, %v405
      %vm445 = vcmask 1043456
      %v447 = vsel %vm445, %v438, %v408
      %v449 = vsel %vm445, %v440, %v409
      %v451 = vsel %vm445, %v442, %v410
      %v453 = vsel %vm445, %v444, %v411
      %vm454 = vcmask 1045504
      %v456 = vsel %vm454, %v447, %v414
      %v459 = vsel %vm454, %v449, %v415
      %v462 = vsel %vm454, %v451, %v416
      %v465 = vsel %vm454, %v453, %v417
      %v469 = vsel %vm436, %v280, %v420
      %v471 = vsel %vm436, %v283, %v421
      %v474 = vsel %vm436, %v293, %v422
      %v476 = vsel %vm436, %v295, %v423
      %v478 = vsel %vm445, %v469, %v426
      %v480 = vsel %vm445, %v471, %v427
      %v482 = vsel %vm445, %v474, %v428
      %v484 = vsel %vm445, %v476, %v429
      %v486 = vsel %vm454, %v478, %v432
      %v489 = vsel %vm454, %v480, %v433
      %v492 = vsel %vm454, %v482, %v434
      %v495 = vsel %vm454, %v484, %v435
      %v497 = vld [vmem:[%s1] sm:$0xf]
      %v498 = vld [vmem:[%s2] sm:$0xff]
      %500 = vset.pattern.permute.xlu0 0
      %501 = vperm.xlu0 %500, %v498
      %v502 = vpop.permute.xlu0 %501
      %vm504 = vcmask 293888
      %v506 = vsel %vm504, %v497, 0
      %v509 = vsel %vm436, %v384, 0
      %v511 = vsel %vm436, %v387, 0
      %v514 = vsel %vm436, %v397, 0
      %v516 = vsel %vm436, %v399, 0
      %518 = vmatpush.bf16.msra.mxu0 0
      %519 = vmatpush.bf16.msra.mxu0 0
      %520 = vmatpush.bf16.msra.mxu0 0
      %521 = vmatpush.bf16.msra.mxu0 0
      %522 = vmatpush.bf16.msra.mxu0 0
      %523 = vmatpush.bf16.msra.mxu0 %v509
      %524 = vmatpush.bf16.msra.mxu0 %v486
      %525 = vmatpush.bf16.msra.mxu0 %v456
      %526 = vmatmul.bf16.gmra.mxu0 %v506
      %v527 = vpop.f32.mrf.mxu0
      %v528 = vadd.f32 %v502, %v527
      %v529 = vpop.f32.mrf.mxu0
      %530 = vdwg.mxu0
      %531 = vmatpush.bf16.msra.mxu0 0
      %532 = vmatpush.bf16.msra.mxu0 0
      %533 = vmatpush.bf16.msra.mxu0 0
      %534 = vmatpush.bf16.msra.mxu0 0
      %535 = vmatpush.bf16.msra.mxu0 0
      %536 = vmatpush.bf16.msra.mxu0 %v511
      %537 = vmatpush.bf16.msra.mxu0 %v489
      %538 = vmatpush.bf16.msra.mxu0 %v459
      %539 = vmatmul.bf16.gmra.mxu0 %v506
      %v540 = vpop.f32.mrf.mxu0
      %v541 = vadd.f32 %v502, %v540
      %v542 = vpop.f32.mrf.mxu0
      %543 = vdwg.mxu0
      %544 = vmatpush.bf16.msra.mxu0 0
      %545 = vmatpush.bf16.msra.mxu0 0
      %546 = vmatpush.bf16.msra.mxu0 0
      %547 = vmatpush.bf16.msra.mxu0 0
      %548 = vmatpush.bf16.msra.mxu0 0
      %549 = vmatpush.bf16.msra.mxu0 %v514
      %550 = vmatpush.bf16.msra.mxu0 %v492
      %551 = vmatpush.bf16.msra.mxu0 %v462
      %552 = vmatmul.bf16.gmra.mxu0 %v506
      %v553 = vpop.f32.mrf.mxu0
      %v554 = vadd.f32 %v502, %v553
      %v555 = vpop.f32.mrf.mxu0
      %556 = vdwg.mxu0
      %557 = vmatpush.bf16.msra.mxu0 0
      %558 = vmatpush.bf16.msra.mxu0 0
      %559 = vmatpush.bf16.msra.mxu0 0
      %560 = vmatpush.bf16.msra.mxu0 0
      %561 = vmatpush.bf16.msra.mxu0 0
      %562 = vmatpush.bf16.msra.mxu0 %v516
      %563 = vmatpush.bf16.msra.mxu0 %v495
      %564 = vmatpush.bf16.msra.mxu0 %v465
      %565 = vmatmul.bf16.gmra.mxu0 %v506
      %v566 = vpop.f32.mrf.mxu0
      %v567 = vadd.f32 %v502, %v566
      %v568 = vpop.f32.mrf.mxu0
      %569 = vdwg.mxu0
      %570 = vst [vmem:[%s177] sm:$0xff] %v528
      %571 = vst [vmem:[%s177 + $0x8] sm:$0xff] %v541
      %s572 = scalar_lea.vmem %s177, 16
      %573 = vst [vmem:[%s572] sm:$0xff] %v554
      %574 = vst [vmem:[%s572 + $0x8] sm:$0xff] %v567
      %s575 = smul.u32 2, %s14
      %p576 = scmp.lt.s32.totalorder %s575, 3
      %s577 = scalar_select %p576, %s575, 3
      %s578 = smul.addr %s577, 2
      %s579 = smul.addr %s578, 8
      %s580 = scalar_lea.vmem %s3, %s579
      // Predicated region
      $region33: #{concat_conv2d.1} parent=31 // pred_check
        %p581 = pneg %p100
      $region34: #{concat_conv2d.1} parent=31 // pred_check_branch
        %583 = sbr.rel (%p581) target = $region36
      $region35: #{concat_conv2d.1} parent=31 // pred_region
        %s584 = smul.u32 2, %s14
      $region36: #{concat_conv2d.1} parent=31 // pred_fallthru
        _
    $region32: #{concat_conv2d.1} parent=5 // pred_fallthru
      _
    %p585 = scmp.le.s32.totalorder 2, %s9
    // Predicated region
    $region37: #{concat_conv2d.1} parent=5 // pred_check
      %p586 = pneg %p585
    $region38: #{concat_conv2d.1} parent=5 // pred_check_branch
      %588 = sbr.rel (%p586) target = $region40
    $region39: #{concat_conv2d.1} parent=5 // pred_region
      %s589 = ssub.s32 %s9, 2
      // Predicated region
      $region41: #{concat_conv2d.1} parent=39 // pred_check
        %p590 = pneg %p106
      $region42: #{concat_conv2d.1} parent=39 // pred_check_branch
        %592 = sbr.rel (%p590) target = $region44
      $region43: #{concat_conv2d.1} parent=39 // pred_region
        %s593 = smul.u32 2, %s15
        %p594 = scmp.lt.s32.totalorder %s593, 3
        %s595 = scalar_select %p594, %s593, 3
        %s596 = smul.addr %s595, 2
        %s597 = smul.addr %s596, 8
        %s598 = scalar_lea.vmem %s3, %s597
      $region44: #{concat_conv2d.1} parent=39 // pred_fallthru
        _
    $region40: #{concat_conv2d.1} parent=5 // pred_fallthru
      _
  $region6: #{concat_conv2d.1} parent=0 // loop_footer
    %s13 = sadd.s32 1, %s9
  $region7: #{concat_conv2d.1} parent=0 // loop_footer_branch
    %8 = sbr.rel target = $region3
  $region8: #{concat_conv2d.1} parent=0 // loop_exit
    _

</llo_original>
